<compile_context>
chip_gen: v5e
topology: v5e:2x2
jax: 0.10.0
libtpu: 0.0.40
codegen_flags: <defaults>
</compile_context>

<pallas_src>
import math

import jax
import jax.numpy as jnp
from jax.experimental import pallas as pl
from jax.experimental.pallas import tpu as pltpu


def _round_up(x, m):
    return ((x + m - 1) // m) * m


def soft_q_kernel(s_ref, a_ref, w1s_ref, w1a_ref, b1_ref, w2_ref, b2_ref,
                  w3_ref, b3_ref, o_ref):
    # Layer 1: fused concat -> split matmul (both on MXU), bias + ReLU on VPU.
    h1 = (jnp.dot(s_ref[...], w1s_ref[...], preferred_element_type=jnp.float32)
          + jnp.dot(a_ref[...], w1a_ref[...], preferred_element_type=jnp.float32)
          + b1_ref[...])
    h1 = jnp.maximum(h1, 0.0)
    # Layer 2.
    h2 = jnp.dot(h1, w2_ref[...], preferred_element_type=jnp.float32) + b2_ref[...]
    h2 = jnp.maximum(h2, 0.0)
    # Layer 3: output width 1 -> VPU multiply + lane reduce instead of MXU matmul.
    q = jnp.sum(h2 * w3_ref[...], axis=-1, keepdims=True) + b3_ref[...]
    o_ref[...] = q.astype(o_ref.dtype)


def soft_q_forward(state, action, kernel_params, *, tile_b=256):
    """state: [B, num_inputs], action: [B, num_actions] -> q: [B, 1] (float32)."""
    w1s, w1a, b1, w2, b2, w3_row, b3 = kernel_params
    B = state.shape[0]
    n_i = state.shape[1]
    n_a = action.shape[1]
    H = w2.shape[1]  # lane-padded hidden width (multiple of 128)

    # Batch tile: multiple of 8 sublanes; pad B up to a whole number of tiles.
    TB = min(tile_b, _round_up(B, 8))
    B_pad = _round_up(B, TB)
    if B_pad != B:
        pad = B_pad - B
        state = jnp.pad(state, ((0, pad), (0, 0)))
        action = jnp.pad(action, ((0, pad), (0, 0)))

    batch_map = lambda i: (i, 0)   # batch-tiled operands
    resident = lambda i: (0, 0)    # weights/biases: same block every step -> stay in VMEM

    grid_spec = pltpu.PrefetchScalarGridSpec(
        num_scalar_prefetch=0,
        grid=(B_pad // TB,),
        in_specs=[
            pl.BlockSpec((TB, n_i), batch_map),   # state tile
            pl.BlockSpec((TB, n_a), batch_map),   # action tile
            pl.BlockSpec((n_i, H), resident),     # w1 (state rows)
            pl.BlockSpec((n_a, H), resident),     # w1 (action rows)
            pl.BlockSpec((1, H), resident),       # b1
            pl.BlockSpec((H, H), resident),       # w2
            pl.BlockSpec((1, H), resident),       # b2
            pl.BlockSpec((1, H), resident),       # w3 as a row
            pl.BlockSpec((1, 1), resident),       # b3
        ],
        out_specs=pl.BlockSpec((TB, 1), batch_map),
    )

    q = pl.pallas_call(
        soft_q_kernel,
        out_shape=jax.ShapeDtypeStruct((B_pad, 1), jnp.float32),
        grid_spec=grid_spec,
        compiler_params=pltpu.CompilerParams(
            # Batch tiles are independent -> parallel (megacore sharding on v7x).
            dimension_semantics=("parallel",),
            # Per-step footprint (weights + 2x batch tile buffers) is tiny; keep a
            # conservative explicit cap that also fits v7x's smaller VMEM.
            vmem_limit_bytes=32 * 1024 * 1024,
        ),
    )(state, action, w1s, w1a, b1, w2, b2, w3_row, b3)

    return q[:B]


def init_soft_q_params(key, num_inputs, num_actions, hidden_size, init_w=0.003):
    """Logical params mimicking nn.Linear defaults + uniform(-init_w, init_w) on
    linear3. Weights stored [in, out] (transposed vs torch)."""
    d_in = num_inputs + num_actions
    k = jax.random.split(key, 6)

    def linear_init(kw, kb, fan_in, fan_out):
        bound = 1.0 / math.sqrt(fan_in)
        w = jax.random.uniform(kw, (fan_in, fan_out), jnp.float32, -bound, bound)
        b = jax.random.uniform(kb, (1, fan_out), jnp.float32, -bound, bound)
        return w, b

    w1, b1 = linear_init(k[0], k[1], d_in, hidden_size)
    w2, b2 = linear_init(k[2], k[3], hidden_size, hidden_size)
    w3 = jax.random.uniform(k[4], (hidden_size, 1), jnp.float32, -init_w, init_w)
    b3 = jax.random.uniform(k[5], (1, 1), jnp.float32, -init_w, init_w)
    return (w1, b1, w2, b2, w3, b3)


def prepare_params_for_kernel(params, num_inputs, lane=128):
    """One-time preprocessing (outside the kernel):
    - split w1 into state/action halves (fuses the concat into the kernel),
    - zero-pad the hidden width to a multiple of 128 lanes (lane-dense vregs),
    - store w3 as a (1, H_pad) row for the VPU reduction.
    Zero-padded columns get bias 0 -> relu(0)=0 -> zero rows in w2/w3 contribute
    nothing, so the math is identical to the unpadded network."""
    w1, b1, w2, b2, w3, b3 = params
    H = w2.shape[1]
    H_pad = _round_up(H, lane)
    ph = H_pad - H
    w1s = jnp.pad(w1[:num_inputs], ((0, 0), (0, ph)))
    w1a = jnp.pad(w1[num_inputs:], ((0, 0), (0, ph)))
    b1p = jnp.pad(b1, ((0, 0), (0, ph)))
    w2p = jnp.pad(w2, ((0, ph), (0, ph)))
    b2p = jnp.pad(b2, ((0, 0), (0, ph)))
    w3_row = jnp.pad(w3.T, ((0, 0), (0, ph)))  # (1, H_pad)
    return (w1s, w1a, b1p, w2p, b2p, w3_row, b3)


def soft_q_reference(state, action, params):
    """Pure-JAX reference on the ORIGINAL (unpadded, unsplit) params — matches the
    torch forward exactly and also validates the padding/splitting transform."""
    w1, b1, w2, b2, w3, b3 = params
    x = jnp.concatenate([state, action], axis=1)
    h1 = jnp.maximum(x @ w1 + b1, 0.0)
    h2 = jnp.maximum(h1 @ w2 + b2, 0.0)
    return h2 @ w3 + b3


if __name__ == "__main__":
    batch = 2
    num_inputs = 8
    num_actions = 4
    hidden_size = 32

    root = jax.random.PRNGKey(0)
    k_state, k_action, k_params = jax.random.split(root, 3)

    state = jax.random.normal(k_state, (batch, num_inputs), jnp.float32)
    action = jax.random.normal(k_action, (batch, num_actions), jnp.float32)

    params = init_soft_q_params(k_params, num_inputs, num_actions, hidden_size)
    kernel_params = prepare_params_for_kernel(params, num_inputs)

    q = soft_q_forward(state, action, kernel_params)
    q = jax.block_until_ready(q)

    q_ref = soft_q_reference(state, action, params)
    assert q.shape == (batch, 1), q.shape
    assert jnp.allclose(q, q_ref, atol=1e-5, rtol=1e-5), (q, q_ref)

    print("KERNEL_OK")
</pallas_src>

<mosaic_0001>
module attributes {stable_mosaic.version = 11 : i64} {
  func.func @soft_q_kernel(%arg0: i32, %arg1: memref<8x8xf32, #tpu.memory_space<vmem>>, %arg2: memref<8x4xf32, #tpu.memory_space<vmem>>, %arg3: memref<8x128xf32, #tpu.memory_space<vmem>>, %arg4: memref<4x128xf32, #tpu.memory_space<vmem>>, %arg5: memref<1x128xf32, #tpu.memory_space<vmem>>, %arg6: memref<128x128xf32, #tpu.memory_space<vmem>>, %arg7: memref<1x128xf32, #tpu.memory_space<vmem>>, %arg8: memref<1x128xf32, #tpu.memory_space<vmem>>, %arg9: memref<1x1xf32, #tpu.memory_space<vmem>>, %arg10: memref<8x1xf32, #tpu.memory_space<vmem>>) attributes {dimension_semantics = [#tpu.dimension_semantics<parallel>], iteration_bounds = array<i64: 1>, scalar_prefetch = 0 : i64, scratch_operands = 0 : i64, tpu.core_type = #tpu.core_type<tc>, window_params = [{transform_indices = @transform_0, window_bounds = array<i64: 8, 8>}, {transform_indices = @transform_1, window_bounds = array<i64: 8, 4>}, {pipeline_mode = #tpu.pipeline_mode<synchronous>, transform_indices = @transform_2, window_bounds = array<i64: 8, 128>}, {pipeline_mode = #tpu.pipeline_mode<synchronous>, transform_indices = @transform_3, window_bounds = array<i64: 4, 128>}, {pipeline_mode = #tpu.pipeline_mode<synchronous>, transform_indices = @transform_4, window_bounds = array<i64: 1, 128>}, {pipeline_mode = #tpu.pipeline_mode<synchronous>, transform_indices = @transform_5, window_bounds = array<i64: 128, 128>}, {pipeline_mode = #tpu.pipeline_mode<synchronous>, transform_indices = @transform_6, window_bounds = array<i64: 1, 128>}, {pipeline_mode = #tpu.pipeline_mode<synchronous>, transform_indices = @transform_7, window_bounds = array<i64: 1, 128>}, {pipeline_mode = #tpu.pipeline_mode<synchronous>, transform_indices = @transform_8, window_bounds = array<i64: 1, 1>}, {transform_indices = @transform_9, window_bounds = array<i64: 8, 1>}]} {
    %c0 = arith.constant 0 : index
    %c0_0 = arith.constant 0 : index
    %0 = vector.load %arg1[%c0, %c0_0] : memref<8x8xf32, #tpu.memory_space<vmem>>, vector<8x8xf32>
    %c0_1 = arith.constant 0 : index
    %c0_2 = arith.constant 0 : index
    %1 = vector.load %arg3[%c0_1, %c0_2] : memref<8x128xf32, #tpu.memory_space<vmem>>, vector<8x128xf32>
    %cst = arith.constant dense<0.000000e+00> : vector<8x128xf32>
    %2 = tpu.matmul %0, %1, %cst {dimension_numbers = #tpu.dot_dimension_numbers<[1], [0], [0], [1], [0, 0, 1, 1], [], []>} : vector<8x8xf32>, vector<8x128xf32>, vector<8x128xf32> -> vector<8x128xf32>
    %c0_3 = arith.constant 0 : index
    %c0_4 = arith.constant 0 : index
    %3 = vector.load %arg2[%c0_3, %c0_4] : memref<8x4xf32, #tpu.memory_space<vmem>>, vector<8x4xf32>
    %c0_5 = arith.constant 0 : index
    %c0_6 = arith.constant 0 : index
    %4 = vector.load %arg4[%c0_5, %c0_6] : memref<4x128xf32, #tpu.memory_space<vmem>>, vector<4x128xf32>
    %cst_7 = arith.constant dense<0.000000e+00> : vector<8x128xf32>
    %5 = tpu.matmul %3, %4, %cst_7 {dimension_numbers = #tpu.dot_dimension_numbers<[1], [0], [0], [1], [0, 0, 1, 1], [], []>} : vector<8x4xf32>, vector<4x128xf32>, vector<8x128xf32> -> vector<8x128xf32>
    %6 = arith.addf %2, %5 : vector<8x128xf32>
    %c0_8 = arith.constant 0 : index
    %c0_9 = arith.constant 0 : index
    %7 = vector.load %arg5[%c0_8, %c0_9] : memref<1x128xf32, #tpu.memory_space<vmem>>, vector<1x128xf32>
    %8 = vector.broadcast %7 : vector<1x128xf32> to vector<8x128xf32>
    %9 = arith.addf %6, %8 : vector<8x128xf32>
    %cst_10 = arith.constant 0.000000e+00 : f32
    %10 = vector.broadcast %cst_10 : f32 to vector<8x128xf32>
    %11 = arith.maximumf %9, %10 : vector<8x128xf32>
    %c0_11 = arith.constant 0 : index
    %c0_12 = arith.constant 0 : index
    %12 = vector.load %arg6[%c0_11, %c0_12] : memref<128x128xf32, #tpu.memory_space<vmem>>, vector<128x128xf32>
    %cst_13 = arith.constant dense<0.000000e+00> : vector<8x128xf32>
    %13 = tpu.matmul %11, %12, %cst_13 {dimension_numbers = #tpu.dot_dimension_numbers<[1], [0], [0], [1], [0, 0, 1, 1], [], []>} : vector<8x128xf32>, vector<128x128xf32>, vector<8x128xf32> -> vector<8x128xf32>
    %c0_14 = arith.constant 0 : index
    %c0_15 = arith.constant 0 : index
    %14 = vector.load %arg7[%c0_14, %c0_15] : memref<1x128xf32, #tpu.memory_space<vmem>>, vector<1x128xf32>
    %15 = vector.broadcast %14 : vector<1x128xf32> to vector<8x128xf32>
    %16 = arith.addf %13, %15 : vector<8x128xf32>
    %cst_16 = arith.constant 0.000000e+00 : f32
    %17 = vector.broadcast %cst_16 : f32 to vector<8x128xf32>
    %18 = arith.maximumf %16, %17 : vector<8x128xf32>
    %c0_17 = arith.constant 0 : index
    %c0_18 = arith.constant 0 : index
    %19 = vector.load %arg8[%c0_17, %c0_18] : memref<1x128xf32, #tpu.memory_space<vmem>>, vector<1x128xf32>
    %20 = vector.broadcast %19 : vector<1x128xf32> to vector<8x128xf32>
    %21 = arith.mulf %18, %20 : vector<8x128xf32>
    %cst_19 = arith.constant dense<0.000000e+00> : vector<8xf32>
    %22 = vector.multi_reduction <add>, %21, %cst_19 [1] : vector<8x128xf32> to vector<8xf32>
    %23 = vector.shape_cast %22 : vector<8xf32> to vector<8x1xf32>
    %c0_20 = arith.constant 0 : index
    %c0_21 = arith.constant 0 : index
    %24 = vector.load %arg9[%c0_20, %c0_21] : memref<1x1xf32, #tpu.memory_space<vmem>>, vector<1x1xf32>
    %25 = vector.broadcast %24 : vector<1x1xf32> to vector<8x1xf32>
    %26 = arith.addf %23, %25 : vector<8x1xf32>
    %c0_22 = arith.constant 0 : index
    %c0_23 = arith.constant 0 : index
    %27 = vector.load %arg10[%c0_22, %c0_23] : memref<8x1xf32, #tpu.memory_space<vmem>>, vector<8x1xf32>
    tpu.vector_store %arg10[%c0_22, %c0_23], %26 {strides = array<i32>} : memref<8x1xf32, #tpu.memory_space<vmem>>, vector<8x1xf32>,
    return
  }
  func.func @transform_0(%arg0: i32) -> (i32, i32) {
    %c0_i32 = arith.constant 0 : i32
    %c0_i32_0 = arith.constant 0 : i32
    return %arg0, %c0_i32 : i32, i32
  }
  func.func @transform_1(%arg0: i32) -> (i32, i32) {
    %c0_i32 = arith.constant 0 : i32
    %c0_i32_0 = arith.constant 0 : i32
    return %arg0, %c0_i32 : i32, i32
  }
  func.func @transform_2(%arg0: i32) -> (i32, i32) {
    %c0_i32 = arith.constant 0 : i32
    %c0_i32_0 = arith.constant 0 : i32
    %c0_i32_1 = arith.constant 0 : i32
    return %c0_i32, %c0_i32_0 : i32, i32
  }
  func.func @transform_3(%arg0: i32) -> (i32, i32) {
    %c0_i32 = arith.constant 0 : i32
    %c0_i32_0 = arith.constant 0 : i32
    %c0_i32_1 = arith.constant 0 : i32
    return %c0_i32, %c0_i32_0 : i32, i32
  }
  func.func @transform_4(%arg0: i32) -> (i32, i32) {
    %c0_i32 = arith.constant 0 : i32
    %c0_i32_0 = arith.constant 0 : i32
    %c0_i32_1 = arith.constant 0 : i32
    return %c0_i32, %c0_i32_0 : i32, i32
  }
  func.func @transform_5(%arg0: i32) -> (i32, i32) {
    %c0_i32 = arith.constant 0 : i32
    %c0_i32_0 = arith.constant 0 : i32
    %c0_i32_1 = arith.constant 0 : i32
    return %c0_i32, %c0_i32_0 : i32, i32
  }
  func.func @transform_6(%arg0: i32) -> (i32, i32) {
    %c0_i32 = arith.constant 0 : i32
    %c0_i32_0 = arith.constant 0 : i32
    %c0_i32_1 = arith.constant 0 : i32
    return %c0_i32, %c0_i32_0 : i32, i32
  }
  func.func @transform_7(%arg0: i32) -> (i32, i32) {
    %c0_i32 = arith.constant 0 : i32
    %c0_i32_0 = arith.constant 0 : i32
    %c0_i32_1 = arith.constant 0 : i32
    return %c0_i32, %c0_i32_0 : i32, i32
  }
  func.func @transform_8(%arg0: i32) -> (i32, i32) {
    %c0_i32 = arith.constant 0 : i32
    %c0_i32_0 = arith.constant 0 : i32
    %c0_i32_1 = arith.constant 0 : i32
    return %c0_i32, %c0_i32_0 : i32, i32
  }
  func.func @transform_9(%arg0: i32) -> (i32, i32) {
    %c0_i32 = arith.constant 0 : i32
    %c0_i32_0 = arith.constant 0 : i32
    return %arg0, %c0_i32 : i32, i32
  }
}

</mosaic_0001>

<llo_original>
// kernel: tpu_custom_call.1
$region0: #{tpu_custom_call.1}
  #allocation0 [shape = 'u32[]', space=smem, size = 0x4, offset = 0x4, fixed_abs, tag = 'smem constant byte address 0x4 - core index']
  #allocation1 [shape = 'u32[72,128]{1,0:T(1,128)}', space=vmem, size = 0x9000, scoped, tag = 'internal scratch']
  #allocation2 [shape = 'f32[1,1]{1,0:T(1,128)S(1)}', space=vmem, size = 0x200, scoped, tag = 'scoped memory for tpu_custom_call.1']
  %s0 = inlined_call_operand.vmem [shape: f32[8,8], index: 0, kind: input, shape index: {}]
  %s1 = inlined_call_operand.vmem [shape: f32[8,4], index: 1, kind: input, shape index: {}]
  %s2 = inlined_call_operand.hbm [shape: f32[8,128], index: 2, kind: input, shape index: {}]
  %s3 = inlined_call_operand.vmem [shape: f32[4,128], index: 3, kind: input, shape index: {}]
  %s4 = inlined_call_operand.vmem [shape: f32[1,128], index: 4, kind: input, shape index: {}]
  %s5 = inlined_call_operand.hbm [shape: f32[128,128], index: 5, kind: input, shape index: {}]
  %s6 = inlined_call_operand.vmem [shape: f32[1,128], index: 6, kind: input, shape index: {}]
  %s7 = inlined_call_operand.vmem [shape: f32[1,128], index: 7, kind: input, shape index: {}]
  %s8 = inlined_call_operand.<no memory space> [shape: f32[1,1], index: 8, kind: input, shape index: {}]
  %s9 = inlined_call_operand.vmem [shape: f32[8,1], index: 9, kind: output, shape index: {}]
  %s10 = sld [smem:[#allocation0]]
  $region54: #{tpu_custom_call.1} parent=0
    _
  %s12 = ssub.s32 1, %s10
  %s13 = scalar_select 0, %s12, %s10
  %v14 = vstv %s8
  %15 = vst [vmem:[#allocation2] sm:$0x1] %v14
  $region1: #{tpu_custom_call.1} parent=0
    #allocation3 [shape = 'u8[4096]{0}', space=vmem, size = 0x1000, scoped, tag = 'input window, operand 2, single buffered']
    #allocation4 [shape = 's32[1]{0}', space=sflag, size = 0x4, scoped, tag = 'scoped memory for tpu_custom_call.1']
    #allocation5 [shape = 'u8[65536]{0}', space=vmem, size = 0x10000, scoped, tag = 'input window, operand 5, single buffered']
    #allocation6 [shape = 's32[1]{0}', space=sflag, size = 0x4, scoped, tag = 'scoped memory for tpu_custom_call.1']
    %16 = vsyncpa [#allocation4], 0
    %17 = vsyncpa [#allocation6], 0
    // Predicated region
    $region2: #{tpu_custom_call.1} parent=1 // pred_check
      _
    $region3: #{tpu_custom_call.1} parent=1 // pred_check_branch
      %19 = sbr.rel (0) target = $region5
    $region4: #{tpu_custom_call.1} parent=1 // pred_region
      _
    $region5: #{tpu_custom_call.1} parent=1 // pred_fallthru
      _
    // Predicated region
    $region6: #{tpu_custom_call.1} parent=1 // pred_check
      _
    $region7: #{tpu_custom_call.1} parent=1 // pred_check_branch
      %21 = sbr.rel (0) target = $region9
    $region8: #{tpu_custom_call.1} parent=1 // pred_region
      _
    $region9: #{tpu_custom_call.1} parent=1 // pred_fallthru
      _
    // Predicated region
    $region10: #{tpu_custom_call.1} parent=1 // pred_check
      _
    $region11: #{tpu_custom_call.1} parent=1 // pred_check_branch
      %23 = sbr.rel (0) target = $region13
    $region12: #{tpu_custom_call.1} parent=1 // pred_region
      %25 = vsyncadd [#allocation4], 0
      %s27 = sshll.u32 %s2, 4
      %s28 = int_to_ptr.hbm [resolvable:$true] %s27
      %s29 = sshll.u32 [#allocation3], 4
      %s30 = int_to_ptr.vmem [resolvable:$true] %s29
      %32 = dma.hbm_to_vmem [thread:$0]  %s28, 128, %s30, [#allocation4]
    $region13: #{tpu_custom_call.1} parent=1 // pred_fallthru
      _
    // Predicated region
    $region14: #{tpu_custom_call.1} parent=1 // pred_check
      _
    $region15: #{tpu_custom_call.1} parent=1 // pred_check_branch
      %34 = sbr.rel (0) target = $region17
    $region16: #{tpu_custom_call.1} parent=1 // pred_region
      _
    $region17: #{tpu_custom_call.1} parent=1 // pred_fallthru
      _
    // Predicated region
    $region18: #{tpu_custom_call.1} parent=1 // pred_check
      _
    $region19: #{tpu_custom_call.1} parent=1 // pred_check_branch
      %36 = sbr.rel (0) target = $region21
    $region20: #{tpu_custom_call.1} parent=1 // pred_region
      _
    $region21: #{tpu_custom_call.1} parent=1 // pred_fallthru
      _
    // Predicated region
    $region22: #{tpu_custom_call.1} parent=1 // pred_check
      _
    $region23: #{tpu_custom_call.1} parent=1 // pred_check_branch
      %38 = sbr.rel (0) target = $region25
    $region24: #{tpu_custom_call.1} parent=1 // pred_region
      %40 = vsyncadd [#allocation6], 0
      %s41 = sshll.u32 %s5, 4
      %s42 = int_to_ptr.hbm [resolvable:$true] %s41
      %s43 = sshll.u32 [#allocation5], 4
      %s44 = int_to_ptr.vmem [resolvable:$true] %s43
      %49 = dma.hbm_to_vmem [thread:$0]  %s42, 2048, %s44, [#allocation6], 128, 128, 8
    $region25: #{tpu_custom_call.1} parent=1 // pred_fallthru
      _
    // Predicated region
    $region26: #{tpu_custom_call.1} parent=1 // pred_check
      _
    $region27: #{tpu_custom_call.1} parent=1 // pred_check_branch
      %51 = sbr.rel (0) target = $region29
    $region28: #{tpu_custom_call.1} parent=1 // pred_region
      _
    $region29: #{tpu_custom_call.1} parent=1 // pred_fallthru
      _
    // Predicated region
    $region30: #{tpu_custom_call.1} parent=1 // pred_check
      _
    $region31: #{tpu_custom_call.1} parent=1 // pred_check_branch
      %53 = sbr.rel (0) target = $region33
    $region32: #{tpu_custom_call.1} parent=1 // pred_region
      _
    $region33: #{tpu_custom_call.1} parent=1 // pred_fallthru
      _
    // Predicated region
    $region34: #{tpu_custom_call.1} parent=1 // pred_check
      _
    $region35: #{tpu_custom_call.1} parent=1 // pred_check_branch
      %55 = sbr.rel (0) target = $region37
    $region36: #{tpu_custom_call.1} parent=1 // pred_region
      _
    $region37: #{tpu_custom_call.1} parent=1 // pred_fallthru
      _
    // Predicated region
    $region38: #{tpu_custom_call.1} parent=1 // pred_check
      _
    $region39: #{tpu_custom_call.1} parent=1 // pred_check_branch
      %57 = sbr.rel (0) target = $region41
    $region40: #{tpu_custom_call.1} parent=1 // pred_region
      %59 = dma.done [#allocation4], 128
    $region41: #{tpu_custom_call.1} parent=1 // pred_fallthru
      _
    // Predicated region
    $region42: #{tpu_custom_call.1} parent=1 // pred_check
      _
    $region43: #{tpu_custom_call.1} parent=1 // pred_check_branch
      %61 = sbr.rel (0) target = $region45
    $region44: #{tpu_custom_call.1} parent=1 // pred_region
      %63 = dma.done [#allocation6], 2048
    $region45: #{tpu_custom_call.1} parent=1 // pred_fallthru
      _
    %v64 = vld [vmem:[%s0] sm:$0xff]
    %v65 = vld [vmem:[#allocation3] sm:$0xff]
    %v66 = vld [vmem:[%s1] sm:$0xff]
    %v67 = vld [vmem:[%s3] sm:$0xf]
    %vm68 = vcmask 31744
    %v70 = vsel %vm68, %v66, 0
    %vm72 = vcmask 1043456
    %v74 = vsel %vm72, %v67, 0
    %76 = vmatpush.msra.mxu0 0.0
    %77 = vmatpush.msra.mxu0 0.0
    %78 = vmatpush.msra.mxu0 0.0
    %79 = vmatpush.msra.mxu0 0.0
    %80 = vmatpush.msra.mxu0 0.0
    %81 = vmatpush.msra.mxu0 0.0
    %82 = vmatpush.msra.mxu0 0.0
    %83 = vmatpush.msra.mxu0 0.0
    %84 = vmatpush.msra.mxu0 0.0
    %85 = vmatpush.msra.mxu0 0.0
    %86 = vmatpush.msra.mxu0 0.0
    %87 = vmatpush.msra.mxu0 0.0
    %88 = vmatpush.msra.mxu0 0.0
    %89 = vmatpush.msra.mxu0 0.0
    %90 = vmatpush.msra.mxu0 0.0
    %91 = vmatpush.msra.mxu0 %v74
    %92 = vmatmul.f32.gmra.mxu0 %v70
    %v93 = vpop.f32.mrf.mxu0
    %v94 = vadd.f32 0.0, %v93
    %95 = vdwg.mxu0
    %vm96 = vcmask 64512
    %v98 = vsel %vm96, %v64, 0
    %100 = vmatpush.msra.mxu0 0.0
    %101 = vmatpush.msra.mxu0 0.0
    %102 = vmatpush.msra.mxu0 0.0
    %103 = vmatpush.msra.mxu0 0.0
    %104 = vmatpush.msra.mxu0 0.0
    %105 = vmatpush.msra.mxu0 0.0
    %106 = vmatpush.msra.mxu0 0.0
    %107 = vmatpush.msra.mxu0 0.0
    %108 = vmatpush.msra.mxu0 0.0
    %109 = vmatpush.msra.mxu0 0.0
    %110 = vmatpush.msra.mxu0 0.0
    %111 = vmatpush.msra.mxu0 0.0
    %112 = vmatpush.msra.mxu0 0.0
    %113 = vmatpush.msra.mxu0 0.0
    %114 = vmatpush.msra.mxu0 0.0
    %115 = vmatpush.msra.mxu0 %v65
    %116 = vmatmul.f32.gmra.mxu0 %v98
    %v117 = vpop.f32.mrf.mxu0
    %v118 = vadd.f32 %v94, %v117
    %119 = vdwg.mxu0
    %v120 = vld [vmem:[%s4] sm:$0x1]
    %v122 = vperm.slane %v120, 0
    %v124 = vadd.f32 %v118, %v122
    %v125 = vmax.f32 %v124, 0.0
    %v126 = vld [vmem:[#allocation5] sm:$0xff]
    %v127 = vld [vmem:[#allocation5 + $0x8] sm:$0xff]
    %v128 = vld [vmem:[#allocation5 + $0x10] sm:$0xff]
    %v129 = vld [vmem:[#allocation5 + $0x18] sm:$0xff]
    %v130 = vld [vmem:[#allocation5 + $0x20] sm:$0xff]
    %v131 = vld [vmem:[#allocation5 + $0x28] sm:$0xff]
    %v132 = vld [vmem:[#allocation5 + $0x30] sm:$0xff]
    %v133 = vld [vmem:[#allocation5 + $0x38] sm:$0xff]
    %v134 = vld [vmem:[#allocation5 + $0x40] sm:$0xff]
    %v135 = vld [vmem:[#allocation5 + $0x48] sm:$0xff]
    %v136 = vld [vmem:[#allocation5 + $0x50] sm:$0xff]
    %v137 = vld [vmem:[#allocation5 + $0x58] sm:$0xff]
    %v138 = vld [vmem:[#allocation5 + $0x60] sm:$0xff]
    %v139 = vld [vmem:[#allocation5 + $0x68] sm:$0xff]
    %v140 = vld [vmem:[#allocation5 + $0x70] sm:$0xff]
    %v141 = vld [vmem:[#allocation5 + $0x78] sm:$0xff]
    %v142 = vld [vmem:[%s6] sm:$0x1]
    %v144 = vperm.slane %v142, 0
    %146 = vmatpush.msra.mxu0 %v141
    %147 = vmatpush.msra.mxu0 %v140
    %148 = vmatpush.msra.mxu0 %v139
    %149 = vmatpush.msra.mxu0 %v138
    %150 = vmatpush.msra.mxu0 %v137
    %151 = vmatpush.msra.mxu0 %v136
    %152 = vmatpush.msra.mxu0 %v135
    %153 = vmatpush.msra.mxu0 %v134
    %154 = vmatpush.msra.mxu0 %v133
    %155 = vmatpush.msra.mxu0 %v132
    %156 = vmatpush.msra.mxu0 %v131
    %157 = vmatpush.msra.mxu0 %v130
    %158 = vmatpush.msra.mxu0 %v129
    %159 = vmatpush.msra.mxu0 %v128
    %160 = vmatpush.msra.mxu0 %v127
    %161 = vmatpush.msra.mxu0 %v126
    %162 = vmatmul.f32.gmra.mxu0 %v125
    %v163 = vpop.f32.mrf.mxu0
    %v164 = vadd.f32 %v144, %v163
    %165 = vdwg.mxu0
    %v166 = vmax.f32 %v164, 0.0
    %v167 = vld [vmem:[%s7] sm:$0x1]
    %v169 = vperm.slane %v167, 0
    %v171 = vmul.f32 %v166, %v169
    %172 = vadd.xlane.f32.xlu0 %v171
    %v173 = vpop.xlane.xlu0 %172
    %v174 = vld [vmem:[#allocation2] sm:$0x1]
    %v176 = vperm.slane %v174, 0
    %v178 = vadd.f32 %v173, %v176
    %vm179 = vcmask 7168
    %180 = vst.msk [vmem:[%s9] sm:$0xff] %vm179, %v178
    // Predicated region
    $region46: #{tpu_custom_call.1} parent=1 // pred_check
      _
    $region47: #{tpu_custom_call.1} parent=1 // pred_check_branch
      %182 = sbr.rel (0) target = $region49
    $region48: #{tpu_custom_call.1} parent=1 // pred_region
      _
    $region49: #{tpu_custom_call.1} parent=1 // pred_fallthru
      _
    // Predicated region
    $region50: #{tpu_custom_call.1} parent=1 // pred_check
      _
    $region51: #{tpu_custom_call.1} parent=1 // pred_check_branch
      %184 = sbr.rel (0) target = $region53
    $region52: #{tpu_custom_call.1} parent=1 // pred_region
      _
    $region53: #{tpu_custom_call.1} parent=1 // pred_fallthru
      _
    %185 = vsyncpa [#allocation4], 1
    %186 = vsyncpa [#allocation6], 1

</llo_original>
